<compile_context>
chip_gen: v5e
topology: v5e:2x2
jax: 0.10.0
libtpu: 0.0.40
codegen_flags: <defaults>
</compile_context>

<pallas_src>
import functools

import jax
import jax.numpy as jnp
from jax.experimental import pallas as pl
from jax.experimental.pallas import tpu as pltpu


def _round_up(x, m):
    return ((x + m - 1) // m) * m


def _bahdanau_kernel(wq_ref, k_ref, ua_wt_ref, va_w_ref, ctx_ref, wgt_ref,
                     *, s_valid):
    """One grid step = TB batch rows.

    wq_ref   : (TB, Hp)     f32   Wa(query) + b_wa + b_ua (hoisted to host)
    k_ref    : (TB, Sp, Hp) mxu   keys slab (bf16 by default)
    ua_wt_ref: (Hp, Hp)     mxu   Ua weight pre-transposed to (in, out)
    va_w_ref : (1, Hp)      f32   Va weight
    ctx_ref  : (TB, Hp)           context output (lane-dense 2-D slab)
    wgt_ref  : (TB, Sp)           attention weights output (lane-dense slab)
    """
    TB, Sp, Hp = k_ref.shape
    k3 = k_ref[...]                                           # (TB, Sp, Hp)

    # Ua(keys): one (TB*Sp, Hp) x (Hp, Hp) MXU GEMM, f32 accumulation.
    uk = jnp.dot(k3.reshape(TB * Sp, Hp), ua_wt_ref[...],
                 preferred_element_type=jnp.float32)          # (TB*Sp, Hp) f32

    # tanh(Wa(q) + b_wa + Ua(k) + b_ua); biases already folded into wq.
    wq = wq_ref[...].astype(jnp.float32)                      # (TB, Hp)
    t = jnp.tanh(uk.reshape(TB, Sp, Hp) + wq[:, None, :])     # (TB, Sp, Hp) f32

    # Va: contract H (lane axis) with a VPU multiply + lane reduce.
    # (va_b omitted: softmax is shift-invariant and raw scores aren't returned.)
    vw = va_w_ref[...].astype(jnp.float32).reshape(1, 1, Hp)
    scores = jnp.sum(t * vw, axis=-1)                         # (TB, Sp) f32

    # Mask padded sequence positions (static decision at trace time).
    if s_valid < Sp:
        col = jax.lax.broadcasted_iota(jnp.int32, (TB, Sp), 1)
        scores = jnp.where(col < s_valid, scores, jnp.float32(-1e30))

    # Softmax over the sequence (lane) axis, in f32.
    m = jnp.max(scores, axis=-1, keepdims=True)
    e = jnp.exp(scores - m)
    w = e / jnp.sum(e, axis=-1, keepdims=True)                # (TB, Sp) f32
    wgt_ref[...] = w.astype(wgt_ref.dtype)

    # context = sum_s w[b,s] * keys[b,s,:]  — VPU multiply + sublane reduce,
    # f32 accumulation; avoids TB serial M=1 MXU matmuls.
    ctx = jnp.sum(w[:, :, None] * k3.astype(jnp.float32), axis=1)   # (TB, Hp)
    ctx_ref[...] = ctx.astype(ctx_ref.dtype)


def bahdanau_attention(query, keys, wa_w, wa_b, ua_w, ua_b, va_w, va_b,
                       *, block_b=None, mxu_dtype=jnp.bfloat16):
    """query: (B,1,H), keys: (B,S,H); weights follow nn.Linear (out,in) layout.

    Returns (context (B,1,H), weights (B,1,S)) like the PyTorch module.
    mxu_dtype: dtype for the keys slab / Ua^T fed to the MXU (bf16 default;
    pass jnp.float32 for exact f32 parity with the reference)."""
    B, one, H = query.shape
    assert one == 1
    _, S, _ = keys.shape
    out_dtype = query.dtype
    f32 = jnp.float32

    # ---- One-time host-side prep (outside the hot loop) ---------------------
    # Hoisted Wa(query) with BOTH biases folded in (they broadcast over S).
    wq = (query.reshape(B, H).astype(f32) @ wa_w.T.astype(f32)
          + wa_b.astype(f32) + ua_b.astype(f32))               # (B, H) f32
    ua_wt = ua_w.T.astype(mxu_dtype)                           # (H, H) (in,out)
    va_w2 = va_w.reshape(1, H).astype(f32)                     # (1, H)
    del va_b  # softmax(x + c) == softmax(x); dead work, dropped.

    # ---- Pad to TPU-friendly shapes -----------------------------------------
    Hp = _round_up(H, 128)            # lane axis of keys / wq / Ua / ctx
    Sp = _round_up(S, 8)              # sublane axis of keys (masked in-kernel)
    keys_c = keys.astype(mxu_dtype)
    if Hp != H:
        wq = jnp.pad(wq, ((0, 0), (0, Hp - H)))
        ua_wt = jnp.pad(ua_wt, ((0, Hp - H), (0, Hp - H)))
        va_w2 = jnp.pad(va_w2, ((0, 0), (0, Hp - H)))
    if Hp != H or Sp != S:
        keys_c = jnp.pad(keys_c, ((0, 0), (0, Sp - S), (0, Hp - H)))

    key_item = jnp.dtype(mxu_dtype).itemsize
    out_item = jnp.dtype(out_dtype).itemsize

    # ---- Hardware-derived VMEM budget / batch tile ---------------------------
    try:
        vmem_cap = int(pltpu.get_tpu_info().vmem_capacity_bytes)
    except Exception:
        vmem_cap = 64 * 1024 * 1024
    vmem_limit = max(32 * 1024 * 1024,
                     min(vmem_cap - (8 << 20), int(vmem_cap * 0.85)))

    # Per batch row, per grid step: double-buffered keys block + three f32
    # (Sp,Hp) intermediates (uk, tanh, w*k product) + small vectors/outputs.
    per_row = Sp * Hp * (2 * key_item + 3 * 4) + Sp * 6 * 4 + Hp * 6 * 4
    invariant = Hp * Hp * key_item * 2 + Hp * 4 * 4            # Ua^T + Va
    budget = int(vmem_cap * 0.45) - invariant
    # TODO(synk): very large S*H (keys block > budget even at TB=8) would need
    # an S-tiled (flash-style) variant; not required for these shapes.

    if block_b is None:
        tb = max(8, max(budget, 0) // max(per_row, 1))
        tb = max(8, (tb // 8) * 8)                # sublane-aligned tile
        tb = min(tb, _round_up(B, 8))             # no point exceeding batch
        if B >= 16:                               # v7x megacore: >= 2 grid steps
            half = max(8, (((B + 1) // 2) // 8) * 8)
            tb = min(tb, half)
    else:
        tb = max(1, int(block_b))
    TB = tb
    Bp = _round_up(B, TB)

    if Bp != B:
        wq = jnp.pad(wq, ((0, Bp - B), (0, 0)))
        keys_c = jnp.pad(keys_c, ((0, Bp - B), (0, 0), (0, 0)))

    grid = (Bp // TB,)

    flops = 2 * Bp * Sp * Hp * Hp + 6 * Bp * Sp * Hp + 8 * Bp * Sp
    cost = pl.CostEstimate(
        flops=flops,
        transcendentals=Bp * Sp * (Hp + 1),
        bytes_accessed=(Bp * Sp * Hp * key_item + Bp * Hp * 4
                        + Hp * Hp * key_item + Hp * 4
                        + Bp * Hp * out_item + Bp * Sp * out_item))

    kernel_fn = functools.partial(_bahdanau_kernel, s_valid=S)

    def _make_call(single_buffer_invariants):
        inv_kwargs = (dict(pipeline_mode=pl.Buffered(1))
                      if single_buffer_invariants else {})
        grid_spec = pltpu.PrefetchScalarGridSpec(
            num_scalar_prefetch=0,
            grid=grid,
            in_specs=[
                pl.BlockSpec((TB, Hp), lambda b: (b, 0)),          # wq (+biases)
                pl.BlockSpec((TB, Sp, Hp), lambda b: (b, 0, 0)),   # keys slab
                pl.BlockSpec((Hp, Hp), lambda b: (0, 0), **inv_kwargs),  # Ua^T
                pl.BlockSpec((1, Hp), lambda b: (0, 0), **inv_kwargs),   # Va
            ],
            out_specs=[
                pl.BlockSpec((TB, Hp), lambda b: (b, 0)),          # context
                pl.BlockSpec((TB, Sp), lambda b: (b, 0)),          # weights
            ],
        )
        return pl.pallas_call(
            kernel_fn,
            out_shape=(jax.ShapeDtypeStruct((Bp, Hp), out_dtype),
                       jax.ShapeDtypeStruct((Bp, Sp), out_dtype)),
            grid_spec=grid_spec,
            compiler_params=pltpu.CompilerParams(
                dimension_semantics=("parallel",),
                vmem_limit_bytes=vmem_limit),
            cost_estimate=cost,
        )

    try:
        ctx2d, wgt2d = _make_call(True)(wq, keys_c, ua_wt, va_w2)
    except Exception:
        # Fallback: default double-buffering of the grid-invariant operands.
        ctx2d, wgt2d = _make_call(False)(wq, keys_c, ua_wt, va_w2)

    context = ctx2d[:B, :H].reshape(B, 1, H)
    weights = wgt2d[:B, :S].reshape(B, 1, S)
    return context, weights


def bahdanau_reference(query, keys, wa_w, wa_b, ua_w, ua_b, va_w, va_b):
    """Pure-JAX reference mirroring the PyTorch forward."""
    wq = query @ wa_w.T + wa_b                       # (B,1,H)
    uk = keys @ ua_w.T + ua_b                        # (B,S,H)
    scores = jnp.tanh(wq + uk) @ va_w.T + va_b       # (B,S,1)
    scores = jnp.transpose(scores, (0, 2, 1))        # -> (B,1,S)
    weights = jax.nn.softmax(scores, axis=-1)
    context = jnp.einsum('bqs,bsh->bqh', weights, keys)
    return context, weights


if __name__ == "__main__":
    B, S, H = 2, 8, 32
    key = jax.random.PRNGKey(0)
    ks = jax.random.split(key, 8)

    scale = 1.0 / jnp.sqrt(H)
    wa_w = jax.random.uniform(ks[0], (H, H), jnp.float32, -scale, scale)
    wa_b = jax.random.uniform(ks[1], (H,), jnp.float32, -scale, scale)
    ua_w = jax.random.uniform(ks[2], (H, H), jnp.float32, -scale, scale)
    ua_b = jax.random.uniform(ks[3], (H,), jnp.float32, -scale, scale)
    va_w = jax.random.uniform(ks[4], (1, H), jnp.float32, -scale, scale)
    va_b = jax.random.uniform(ks[5], (1,), jnp.float32, -scale, scale)

    query = jax.random.normal(ks[6], (B, 1, H), jnp.float32)
    keys = jax.random.normal(ks[7], (B, S, H), jnp.float32)

    ctx_ref, wgt_ref = bahdanau_reference(query, keys, wa_w, wa_b,
                                          ua_w, ua_b, va_w, va_b)

    # Exact-parity path (f32 MXU operands).
    ctx, wgt = bahdanau_attention(query, keys, wa_w, wa_b, ua_w, ua_b,
                                  va_w, va_b, mxu_dtype=jnp.float32)
    jax.block_until_ready((ctx, wgt))
    assert ctx.shape == (B, 1, H) and wgt.shape == (B, 1, S)
    assert jnp.allclose(ctx, ctx_ref, atol=1e-5, rtol=1e-5)
    assert jnp.allclose(wgt, wgt_ref, atol=1e-5, rtol=1e-5)

    # Default fast path (bf16 keys / Ua^T on the MXU, f32 accumulation).
    ctx_bf, wgt_bf = bahdanau_attention(query, keys, wa_w, wa_b, ua_w, ua_b,
                                        va_w, va_b)
    jax.block_until_ready((ctx_bf, wgt_bf))
    assert ctx_bf.shape == (B, 1, H) and wgt_bf.shape == (B, 1, S)
    assert jnp.allclose(ctx_bf, ctx_ref, atol=5e-2, rtol=5e-2)
    assert jnp.allclose(wgt_bf, wgt_ref, atol=5e-2, rtol=5e-2)

    print("KERNEL_OK")
</pallas_src>

<mosaic_0001>
module attributes {stable_mosaic.version = 11 : i64} {
  func.func @_bahdanau_kernel(%arg0: i32, %arg1: memref<8x128xf32, #tpu.memory_space<vmem>>, %arg2: memref<8x8x128xf32, #tpu.memory_space<vmem>>, %arg3: memref<128x128xf32, #tpu.memory_space<vmem>>, %arg4: memref<1x128xf32, #tpu.memory_space<vmem>>, %arg5: memref<8x128xf32, #tpu.memory_space<vmem>>, %arg6: memref<8x8xf32, #tpu.memory_space<vmem>>) attributes {dimension_semantics = [#tpu.dimension_semantics<parallel>], iteration_bounds = array<i64: 1>, scalar_prefetch = 0 : i64, scratch_operands = 0 : i64, tpu.core_type = #tpu.core_type<tc>, window_params = [{transform_indices = @transform_0, window_bounds = array<i64: 8, 128>}, {transform_indices = @transform_1, window_bounds = array<i64: 8, 8, 128>}, {pipeline_mode = #tpu.pipeline_mode<synchronous>, transform_indices = @transform_2, window_bounds = array<i64: 128, 128>}, {pipeline_mode = #tpu.pipeline_mode<synchronous>, transform_indices = @transform_3, window_bounds = array<i64: 1, 128>}, {transform_indices = @transform_4, window_bounds = array<i64: 8, 128>}, {transform_indices = @transform_5, window_bounds = array<i64: 8, 8>}]} {
    %c0 = arith.constant 0 : index
    %c0_0 = arith.constant 0 : index
    %c0_1 = arith.constant 0 : index
    %0 = vector.load %arg2[%c0, %c0_0, %c0_1] : memref<8x8x128xf32, #tpu.memory_space<vmem>>, vector<8x8x128xf32>
    %1 = vector.shape_cast %0 : vector<8x8x128xf32> to vector<64x128xf32>
    %c0_2 = arith.constant 0 : index
    %c0_3 = arith.constant 0 : index
    %2 = vector.load %arg3[%c0_2, %c0_3] : memref<128x128xf32, #tpu.memory_space<vmem>>, vector<128x128xf32>
    %cst = arith.constant dense<0.000000e+00> : vector<64x128xf32>
    %3 = tpu.matmul %1, %2, %cst {dimension_numbers = #tpu.dot_dimension_numbers<[1], [0], [0], [1], [0, 0, 1, 1], [], []>} : vector<64x128xf32>, vector<128x128xf32>, vector<64x128xf32> -> vector<64x128xf32>
    %c0_4 = arith.constant 0 : index
    %c0_5 = arith.constant 0 : index
    %4 = vector.load %arg1[%c0_4, %c0_5] : memref<8x128xf32, #tpu.memory_space<vmem>>, vector<8x128xf32>
    %5 = vector.shape_cast %3 : vector<64x128xf32> to vector<8x8x128xf32>
    %6 = vector.shape_cast %4 : vector<8x128xf32> to vector<8x1x128xf32>
    %7 = vector.broadcast %6 : vector<8x1x128xf32> to vector<8x8x128xf32>
    %8 = arith.addf %5, %7 : vector<8x8x128xf32>
    %9 = math.tanh %8 : vector<8x8x128xf32>
    %c0_6 = arith.constant 0 : index
    %c0_7 = arith.constant 0 : index
    %10 = vector.load %arg4[%c0_6, %c0_7] : memref<1x128xf32, #tpu.memory_space<vmem>>, vector<1x128xf32>
    %11 = vector.shape_cast %10 : vector<1x128xf32> to vector<1x1x128xf32>
    %12 = vector.broadcast %11 : vector<1x1x128xf32> to vector<8x8x128xf32>
    %13 = arith.mulf %9, %12 : vector<8x8x128xf32>
    %cst_8 = arith.constant dense<0.000000e+00> : vector<8x8xf32>
    %14 = vector.multi_reduction <add>, %13, %cst_8 [2] : vector<8x8x128xf32> to vector<8x8xf32>
    %cst_9 = arith.constant dense<0xFF800000> : vector<8xf32>
    %15 = vector.multi_reduction <maximumf>, %14, %cst_9 [1] : vector<8x8xf32> to vector<8xf32>
    %16 = vector.shape_cast %15 : vector<8xf32> to vector<8x1xf32>
    %17 = vector.broadcast %16 : vector<8x1xf32> to vector<8x8xf32>
    %18 = arith.subf %14, %17 : vector<8x8xf32>
    %19 = math.exp %18 : vector<8x8xf32>
    %cst_10 = arith.constant dense<0.000000e+00> : vector<8xf32>
    %20 = vector.multi_reduction <add>, %19, %cst_10 [1] : vector<8x8xf32> to vector<8xf32>
    %21 = vector.shape_cast %20 : vector<8xf32> to vector<8x1xf32>
    %22 = vector.broadcast %21 : vector<8x1xf32> to vector<8x8xf32>
    %23 = arith.divf %19, %22 : vector<8x8xf32>
    %c0_11 = arith.constant 0 : index
    %c0_12 = arith.constant 0 : index
    %24 = vector.load %arg6[%c0_11, %c0_12] : memref<8x8xf32, #tpu.memory_space<vmem>>, vector<8x8xf32>
    tpu.vector_store %arg6[%c0_11, %c0_12], %23 {strides = array<i32>} : memref<8x8xf32, #tpu.memory_space<vmem>>, vector<8x8xf32>,
    %25 = vector.shape_cast %23 : vector<8x8xf32> to vector<8x8x1xf32>
    %26 = vector.broadcast %25 : vector<8x8x1xf32> to vector<8x8x128xf32>
    %27 = arith.mulf %26, %0 : vector<8x8x128xf32>
    %cst_13 = arith.constant dense<0.000000e+00> : vector<8x128xf32>
    %28 = vector.multi_reduction <add>, %27, %cst_13 [1] : vector<8x8x128xf32> to vector<8x128xf32>
    %c0_14 = arith.constant 0 : index
    %c0_15 = arith.constant 0 : index
    %29 = vector.load %arg5[%c0_14, %c0_15] : memref<8x128xf32, #tpu.memory_space<vmem>>, vector<8x128xf32>
    tpu.vector_store %arg5[%c0_14, %c0_15], %28 {strides = array<i32>} : memref<8x128xf32, #tpu.memory_space<vmem>>, vector<8x128xf32>,
    return
  }
  func.func @transform_0(%arg0: i32) -> (i32, i32) {
    %c0_i32 = arith.constant 0 : i32
    %c0_i32_0 = arith.constant 0 : i32
    return %arg0, %c0_i32 : i32, i32
  }
  func.func @transform_1(%arg0: i32) -> (i32, i32, i32) {
    %c0_i32 = arith.constant 0 : i32
    %c0_i32_0 = arith.constant 0 : i32
    %c0_i32_1 = arith.constant 0 : i32
    return %arg0, %c0_i32, %c0_i32_0 : i32, i32, i32
  }
  func.func @transform_2(%arg0: i32) -> (i32, i32) {
    %c0_i32 = arith.constant 0 : i32
    %c0_i32_0 = arith.constant 0 : i32
    %c0_i32_1 = arith.constant 0 : i32
    return %c0_i32, %c0_i32_0 : i32, i32
  }
  func.func @transform_3(%arg0: i32) -> (i32, i32) {
    %c0_i32 = arith.constant 0 : i32
    %c0_i32_0 = arith.constant 0 : i32
    %c0_i32_1 = arith.constant 0 : i32
    return %c0_i32, %c0_i32_0 : i32, i32
  }
  func.func @transform_4(%arg0: i32) -> (i32, i32) {
    %c0_i32 = arith.constant 0 : i32
    %c0_i32_0 = arith.constant 0 : i32
    return %arg0, %c0_i32 : i32, i32
  }
  func.func @transform_5(%arg0: i32) -> (i32, i32) {
    %c0_i32 = arith.constant 0 : i32
    %c0_i32_0 = arith.constant 0 : i32
    return %arg0, %c0_i32 : i32, i32
  }
}

module attributes {stable_mosaic.version = 11 : i64} {
  func.func @_bahdanau_kernel(%arg0: i32, %arg1: memref<8x128xf32, #tpu.memory_space<vmem>>, %arg2: memref<8x8x128xf32, #tpu.memory_space<vmem>>, %arg3: memref<128x128xf32, #tpu.memory_space<vmem>>, %arg4: memref<1x128xf32, #tpu.memory_space<vmem>>, %arg5: memref<8x128xf32, #tpu.memory_space<vmem>>, %arg6: memref<8x8xf32, #tpu.memory_space<vmem>>) attributes {dimension_semantics = [#tpu.dimension_semantics<parallel>], iteration_bounds = array<i64: 1>, scalar_prefetch = 0 : i64, scratch_operands = 0 : i64, tpu.core_type = #tpu.core_type<tc>, window_params = [{transform_indices = @transform_0, window_bounds = array<i64: 8, 128>}, {transform_indices = @transform_1, window_bounds = array<i64: 8, 8, 128>}, {pipeline_mode = #tpu.pipeline_mode<synchronous>, transform_indices = @transform_2, window_bounds = array<i64: 128, 128>}, {pipeline_mode = #tpu.pipeline_mode<synchronous>, transform_indices = @transform_3, window_bounds = array<i64: 1, 128>}, {transform_indices = @transform_4, window_bounds = array<i64: 8, 128>}, {transform_indices = @transform_5, window_bounds = array<i64: 8, 8>}]} {
    %c0 = arith.constant 0 : index
    %c0_0 = arith.constant 0 : index
    %c0_1 = arith.constant 0 : index
    %0 = vector.load %arg2[%c0, %c0_0, %c0_1] : memref<8x8x128xf32, #tpu.memory_space<vmem>>, vector<8x8x128xf32>
    %1 = vector.shape_cast %0 : vector<8x8x128xf32> to vector<64x128xf32>
    %c0_2 = arith.constant 0 : index
    %c0_3 = arith.constant 0 : index
    %2 = vector.load %arg3[%c0_2, %c0_3] : memref<128x128xf32, #tpu.memory_space<vmem>>, vector<128x128xf32>
    %cst = arith.constant dense<0.000000e+00> : vector<64x128xf32>
    %3 = tpu.matmul %1, %2, %cst {dimension_numbers = #tpu.dot_dimension_numbers<[1], [0], [0], [1], [0, 0, 1, 1], [], []>} : vector<64x128xf32>, vector<128x128xf32>, vector<64x128xf32> -> vector<64x128xf32>
    %c0_4 = arith.constant 0 : index
    %c0_5 = arith.constant 0 : index
    %4 = vector.load %arg1[%c0_4, %c0_5] : memref<8x128xf32, #tpu.memory_space<vmem>>, vector<8x128xf32>
    %5 = vector.shape_cast %3 : vector<64x128xf32> to vector<8x8x128xf32>
    %6 = vector.shape_cast %4 : vector<8x128xf32> to vector<8x1x128xf32>
    %7 = vector.broadcast %6 : vector<8x1x128xf32> to vector<8x8x128xf32>
    %8 = arith.addf %5, %7 : vector<8x8x128xf32>
    %9 = math.tanh %8 : vector<8x8x128xf32>
    %c0_6 = arith.constant 0 : index
    %c0_7 = arith.constant 0 : index
    %10 = vector.load %arg4[%c0_6, %c0_7] : memref<1x128xf32, #tpu.memory_space<vmem>>, vector<1x128xf32>
    %11 = vector.shape_cast %10 : vector<1x128xf32> to vector<1x1x128xf32>
    %12 = vector.broadcast %11 : vector<1x1x128xf32> to vector<8x8x128xf32>
    %13 = arith.mulf %9, %12 : vector<8x8x128xf32>
    %cst_8 = arith.constant dense<0.000000e+00> : vector<8x8xf32>
    %14 = vector.multi_reduction <add>, %13, %cst_8 [2] : vector<8x8x128xf32> to vector<8x8xf32>
    %cst_9 = arith.constant dense<0xFF800000> : vector<8xf32>
    %15 = vector.multi_reduction <maximumf>, %14, %cst_9 [1] : vector<8x8xf32> to vector<8xf32>
    %16 = vector.shape_cast %15 : vector<8xf32> to vector<8x1xf32>
    %17 = vector.broadcast %16 : vector<8x1xf32> to vector<8x8xf32>
    %18 = arith.subf %14, %17 : vector<8x8xf32>
    %19 = math.exp %18 : vector<8x8xf32>
    %cst_10 = arith.constant dense<0.000000e+00> : vector<8xf32>
    %20 = vector.multi_reduction <add>, %19, %cst_10 [1] : vector<8x8xf32> to vector<8xf32>
    %21 = vector.shape_cast %20 : vector<8xf32> to vector<8x1xf32>
    %22 = vector.broadcast %21 : vector<8x1xf32> to vector<8x8xf32>
    %23 = arith.divf %19, %22 : vector<8x8xf32>
    %c0_11 = arith.constant 0 : index
    %c0_12 = arith.constant 0 : index
    %24 = vector.load %arg6[%c0_11, %c0_12] : memref<8x8xf32, #tpu.memory_space<vmem>>, vector<8x8xf32>
    tpu.vector_store %arg6[%c0_11, %c0_12], %23 {strides = array<i32>} : memref<8x8xf32, #tpu.memory_space<vmem>>, vector<8x8xf32>,
    %25 = vector.shape_cast %23 : vector<8x8xf32> to vector<8x8x1xf32>
    %26 = vector.broadcast %25 : vector<8x8x1xf32> to vector<8x8x128xf32>
    %27 = arith.mulf %26, %0 : vector<8x8x128xf32>
    %cst_13 = arith.constant dense<0.000000e+00> : vector<8x128xf32>
    %28 = vector.multi_reduction <add>, %27, %cst_13 [1] : vector<8x8x128xf32> to vector<8x128xf32>
    %c0_14 = arith.constant 0 : index
    %c0_15 = arith.constant 0 : index
    %29 = vector.load %arg5[%c0_14, %c0_15] : memref<8x128xf32, #tpu.memory_space<vmem>>, vector<8x128xf32>
    tpu.vector_store %arg5[%c0_14, %c0_15], %28 {strides = array<i32>} : memref<8x128xf32, #tpu.memory_space<vmem>>, vector<8x128xf32>,
    return
  }
  func.func @transform_0(%arg0: i32) -> (i32, i32) {
    %c0_i32 = arith.constant 0 : i32
    %c0_i32_0 = arith.constant 0 : i32
    return %arg0, %c0_i32 : i32, i32
  }
  func.func @transform_1(%arg0: i32) -> (i32, i32, i32) {
    %c0_i32 = arith.constant 0 : i32
    %c0_i32_0 = arith.constant 0 : i32
    %c0_i32_1 = arith.constant 0 : i32
    return %arg0, %c0_i32, %c0_i32_0 : i32, i32, i32
  }
  func.func @transform_2(%arg0: i32) -> (i32, i32) {
    %c0_i32 = arith.constant 0 : i32
    %c0_i32_0 = arith.constant 0 : i32
    %c0_i32_1 = arith.constant 0 : i32
    return %c0_i32, %c0_i32_0 : i32, i32
  }
  func.func @transform_3(%arg0: i32) -> (i32, i32) {
    %c0_i32 = arith.constant 0 : i32
    %c0_i32_0 = arith.constant 0 : i32
    %c0_i32_1 = arith.constant 0 : i32
    return %c0_i32, %c0_i32_0 : i32, i32
  }
  func.func @transform_4(%arg0: i32) -> (i32, i32) {
    %c0_i32 = arith.constant 0 : i32
    %c0_i32_0 = arith.constant 0 : i32
    return %arg0, %c0_i32 : i32, i32
  }
  func.func @transform_5(%arg0: i32) -> (i32, i32) {
    %c0_i32 = arith.constant 0 : i32
    %c0_i32_0 = arith.constant 0 : i32
    return %arg0, %c0_i32 : i32, i32
  }
}

</mosaic_0001>

<llo_original>
// kernel: tpu_custom_call.1
$region0: #{tpu_custom_call.1}
  #allocation0 [shape = 'u32[]', space=smem, size = 0x4, offset = 0x4, fixed_abs, tag = 'smem constant byte address 0x4 - core index']
  #allocation1 [shape = 'u32[72,128]{1,0:T(1,128)}', space=vmem, size = 0x9000, scoped, tag = 'internal scratch']
  %s0 = inlined_call_operand.hbm [shape: f32[8,128], index: 0, kind: input, shape index: {}]
  %s1 = inlined_call_operand.hbm [shape: f32[8,8,128], index: 1, kind: input, shape index: {}]
  %s2 = inlined_call_operand.hbm [shape: f32[128,128], index: 2, kind: input, shape index: {}]
  %s3 = inlined_call_operand.vmem [shape: f32[1,128], index: 3, kind: input, shape index: {}]
  %s4 = inlined_call_operand.hbm [shape: f32[8,128], index: 4, kind: output, shape index: {0}]
  %s5 = inlined_call_operand.hbm [shape: f32[8,8], index: 5, kind: output, shape index: {1}]
  %6 = xla_tuple %s4, %s5
  %s7 = sld [smem:[#allocation0]]
  $region46: #{tpu_custom_call.1} parent=0
    _
  %s9 = ssub.s32 1, %s7
  %s10 = scalar_select 0, %s9, %s7
  $region1: #{tpu_custom_call.1} parent=0
    #allocation2 [shape = 'u8[4096]{0}', space=vmem, size = 0x1000, scoped, tag = 'input window, operand 0, single buffered']
    #allocation3 [shape = 's32[1]{0}', space=sflag, size = 0x4, scoped, tag = 'scoped memory for tpu_custom_call.1']
    #allocation4 [shape = 's32[1]{0}', space=sflag, size = 0x4, scoped, tag = 'scoped memory for tpu_custom_call.1']
    #allocation5 [shape = 'u8[32768]{0}', space=vmem, size = 0x8000, scoped, tag = 'input window, operand 1, single buffered']
    #allocation6 [shape = 's32[1]{0}', space=sflag, size = 0x4, scoped, tag = 'scoped memory for tpu_custom_call.1']
    #allocation7 [shape = 'u8[65536]{0}', space=vmem, size = 0x10000, scoped, tag = 'input window, operand 2, single buffered']
    #allocation8 [shape = 'u8[4096]{0}', space=vmem, size = 0x1000, scoped, tag = 'output window, operand 0, single buffered']
    #allocation9 [shape = 'u8[4096]{0}', space=vmem, size = 0x1000, scoped, tag = 'output window, operand 1, single buffered']
    #allocation10 [shape = 's32[1]{0}', space=sflag, size = 0x4, scoped, tag = 'scoped memory for tpu_custom_call.1']
    %11 = vsyncpa [#allocation3], 0
    %12 = vsyncpa [#allocation6], 0
    %13 = vsyncpa [#allocation4], 0
    %14 = vsyncpa [#allocation10], 0
    // Predicated region
    $region2: #{tpu_custom_call.1} parent=1 // pred_check
      _
    $region3: #{tpu_custom_call.1} parent=1 // pred_check_branch
      %16 = sbr.rel (0) target = $region5
    $region4: #{tpu_custom_call.1} parent=1 // pred_region
      %18 = vsyncadd [#allocation3], 0
      %s20 = sshll.u32 %s0, 4
      %s21 = int_to_ptr.hbm [resolvable:$true] %s20
      %s22 = sshll.u32 [#allocation2], 4
      %s23 = int_to_ptr.vmem [resolvable:$true] %s22
      %25 = dma.hbm_to_vmem [thread:$0]  %s21, 128, %s23, [#allocation3]
    $region5: #{tpu_custom_call.1} parent=1 // pred_fallthru
      _
    // Predicated region
    $region6: #{tpu_custom_call.1} parent=1 // pred_check
      _
    $region7: #{tpu_custom_call.1} parent=1 // pred_check_branch
      %27 = sbr.rel (0) target = $region9
    $region8: #{tpu_custom_call.1} parent=1 // pred_region
      %29 = vsyncadd [#allocation6], 0
      %s30 = sshll.u32 %s1, 4
      %s31 = int_to_ptr.hbm [resolvable:$true] %s30
      %s32 = sshll.u32 [#allocation5], 4
      %s33 = int_to_ptr.vmem [resolvable:$true] %s32
      %38 = dma.hbm_to_vmem [thread:$0]  %s31, 1024, %s33, [#allocation6], 128, 128, 8
    $region9: #{tpu_custom_call.1} parent=1 // pred_fallthru
      _
    // Predicated region
    $region10: #{tpu_custom_call.1} parent=1 // pred_check
      _
    $region11: #{tpu_custom_call.1} parent=1 // pred_check_branch
      %40 = sbr.rel (0) target = $region13
    $region12: #{tpu_custom_call.1} parent=1 // pred_region
      %42 = vsyncadd [#allocation6], 0
      %s43 = sshll.u32 %s2, 4
      %s44 = int_to_ptr.hbm [resolvable:$true] %s43
      %s45 = sshll.u32 [#allocation7], 4
      %s46 = int_to_ptr.vmem [resolvable:$true] %s45
      %51 = dma.hbm_to_vmem [thread:$0]  %s44, 2048, %s46, [#allocation6], 128, 128, 8
    $region13: #{tpu_custom_call.1} parent=1 // pred_fallthru
      _
    // Predicated region
    $region14: #{tpu_custom_call.1} parent=1 // pred_check
      _
    $region15: #{tpu_custom_call.1} parent=1 // pred_check_branch
      %53 = sbr.rel (0) target = $region17
    $region16: #{tpu_custom_call.1} parent=1 // pred_region
      _
    $region17: #{tpu_custom_call.1} parent=1 // pred_fallthru
      _
    // Predicated region
    $region18: #{tpu_custom_call.1} parent=1 // pred_check
      _
    $region19: #{tpu_custom_call.1} parent=1 // pred_check_branch
      %55 = sbr.rel (0) target = $region21
    $region20: #{tpu_custom_call.1} parent=1 // pred_region
      %57 = dma.done [#allocation3], 128
    $region21: #{tpu_custom_call.1} parent=1 // pred_fallthru
      _
    // Predicated region
    $region22: #{tpu_custom_call.1} parent=1 // pred_check
      _
    $region23: #{tpu_custom_call.1} parent=1 // pred_check_branch
      %59 = sbr.rel (0) target = $region25
    $region24: #{tpu_custom_call.1} parent=1 // pred_region
      %61 = dma.done [#allocation6], 1024
    $region25: #{tpu_custom_call.1} parent=1 // pred_fallthru
      _
    // Predicated region
    $region26: #{tpu_custom_call.1} parent=1 // pred_check
      _
    $region27: #{tpu_custom_call.1} parent=1 // pred_check_branch
      %63 = sbr.rel (0) target = $region29
    $region28: #{tpu_custom_call.1} parent=1 // pred_region
      %65 = dma.done [#allocation6], 2048
    $region29: #{tpu_custom_call.1} parent=1 // pred_fallthru
      _
    %v66 = vld [vmem:[#allocation5] sm:$0xff]
    %v67 = vld [vmem:[#allocation5 + $0x8] sm:$0xff]
    %v68 = vld [vmem:[#allocation5 + $0x10] sm:$0xff]
    %v69 = vld [vmem:[#allocation5 + $0x18] sm:$0xff]
    %v70 = vld [vmem:[#allocation5 + $0x20] sm:$0xff]
    %v71 = vld [vmem:[#allocation5 + $0x28] sm:$0xff]
    %v72 = vld [vmem:[#allocation5 + $0x30] sm:$0xff]
    %v73 = vld [vmem:[#allocation5 + $0x38] sm:$0xff]
    %v74 = vld [vmem:[#allocation7] sm:$0xff]
    %v75 = vld [vmem:[#allocation7 + $0x8] sm:$0xff]
    %v76 = vld [vmem:[#allocation7 + $0x10] sm:$0xff]
    %v77 = vld [vmem:[#allocation7 + $0x18] sm:$0xff]
    %v78 = vld [vmem:[#allocation7 + $0x20] sm:$0xff]
    %v79 = vld [vmem:[#allocation7 + $0x28] sm:$0xff]
    %v80 = vld [vmem:[#allocation7 + $0x30] sm:$0xff]
    %v81 = vld [vmem:[#allocation7 + $0x38] sm:$0xff]
    %v82 = vld [vmem:[#allocation7 + $0x40] sm:$0xff]
    %v83 = vld [vmem:[#allocation7 + $0x48] sm:$0xff]
    %v84 = vld [vmem:[#allocation7 + $0x50] sm:$0xff]
    %v85 = vld [vmem:[#allocation7 + $0x58] sm:$0xff]
    %v86 = vld [vmem:[#allocation7 + $0x60] sm:$0xff]
    %v87 = vld [vmem:[#allocation7 + $0x68] sm:$0xff]
    %v88 = vld [vmem:[#allocation7 + $0x70] sm:$0xff]
    %v89 = vld [vmem:[#allocation7 + $0x78] sm:$0xff]
    %90 = vmatpush.msra.mxu0 %v89
    %91 = vmatpush.msra.mxu0 %v88
    %92 = vmatpush.msra.mxu0 %v87
    %93 = vmatpush.msra.mxu0 %v86
    %94 = vmatpush.msra.mxu0 %v85
    %95 = vmatpush.msra.mxu0 %v84
    %96 = vmatpush.msra.mxu0 %v83
    %97 = vmatpush.msra.mxu0 %v82
    %98 = vmatpush.msra.mxu0 %v81
    %99 = vmatpush.msra.mxu0 %v80
    %100 = vmatpush.msra.mxu0 %v79
    %101 = vmatpush.msra.mxu0 %v78
    %102 = vmatpush.msra.mxu0 %v77
    %103 = vmatpush.msra.mxu0 %v76
    %104 = vmatpush.msra.mxu0 %v75
    %105 = vmatpush.msra.mxu0 %v74
    %106 = vmatmul.f32.gmra.mxu0 %v66
    %v107 = vpop.f32.mrf.mxu0
    %v108 = vadd.f32 0.0, %v107
    %109 = vmatmul.f32.gmra.mxu0 %v67
    %v110 = vpop.f32.mrf.mxu0
    %v111 = vadd.f32 0.0, %v110
    %112 = vmatmul.f32.gmra.mxu0 %v68
    %v113 = vpop.f32.mrf.mxu0
    %v114 = vadd.f32 0.0, %v113
    %115 = vmatmul.f32.gmra.mxu0 %v69
    %v116 = vpop.f32.mrf.mxu0
    %v117 = vadd.f32 0.0, %v116
    %118 = vmatmul.f32.gmra.mxu0 %v70
    %v119 = vpop.f32.mrf.mxu0
    %v120 = vadd.f32 0.0, %v119
    %121 = vmatmul.f32.gmra.mxu0 %v71
    %v122 = vpop.f32.mrf.mxu0
    %v123 = vadd.f32 0.0, %v122
    %124 = vmatmul.f32.gmra.mxu0 %v72
    %v125 = vpop.f32.mrf.mxu0
    %v126 = vadd.f32 0.0, %v125
    %127 = vmatmul.f32.gmra.mxu0 %v73
    %v128 = vpop.f32.mrf.mxu0
    %v129 = vadd.f32 0.0, %v128
    %130 = vdwg.mxu0
    %v131 = vld [vmem:[#allocation2] sm:$0xff]
    %v133 = vrot.slane %v131, 1
    %v134 = vrot.slane %v131, 2
    %v135 = vrot.slane %v131, 3
    %v136 = vrot.slane %v131, 4
    %v137 = vrot.slane %v131, 5
    %v138 = vrot.slane %v131, 6
    %v139 = vrot.slane %v131, 7
    %v140 = vperm.slane %v131, 0
    %v141 = vperm.slane %v133, 0
    %v142 = vperm.slane %v134, 0
    %v143 = vperm.slane %v135, 0
    %v144 = vperm.slane %v136, 0
    %v145 = vperm.slane %v137, 0
    %v146 = vperm.slane %v138, 0
    %v147 = vperm.slane %v139, 0
    %v156 = vadd.f32 %v108, %v140
    %v157 = vadd.f32 %v111, %v141
    %v158 = vadd.f32 %v114, %v142
    %v159 = vadd.f32 %v117, %v143
    %v160 = vadd.f32 %v120, %v144
    %v161 = vadd.f32 %v123, %v145
    %v162 = vadd.f32 %v126, %v146
    %v163 = vadd.f32 %v129, %v147
    %v164 = vtanh.pop %v156
    %v165 = vtanh.pop %v157
    %v166 = vtanh.pop %v158
    %v167 = vtanh.pop %v159
    %v168 = vtanh.pop %v160
    %v169 = vtanh.pop %v161
    %v170 = vtanh.pop %v162
    %v171 = vtanh.pop %v163
    %v172 = vld [vmem:[%s3] sm:$0x1]
    %v174 = vperm.slane %v172, 0
    %v176 = vmul.f32 %v164, %v174
    %v177 = vmul.f32 %v165, %v174
    %v178 = vmul.f32 %v166, %v174
    %v179 = vmul.f32 %v167, %v174
    %v180 = vmul.f32 %v168, %v174
    %v181 = vmul.f32 %v169, %v174
    %v182 = vmul.f32 %v170, %v174
    %v183 = vmul.f32 %v171, %v174
    %184 = vadd.xlane.f32.xlu0 %v176
    %v185 = vpop.xlane.xlu0 %184
    %186 = vadd.xlane.f32.xlu0 %v177
    %v187 = vpop.xlane.xlu0 %186
    %188 = vadd.xlane.f32.xlu0 %v178
    %v189 = vpop.xlane.xlu0 %188
    %190 = vadd.xlane.f32.xlu0 %v179
    %v191 = vpop.xlane.xlu0 %190
    %192 = vadd.xlane.f32.xlu0 %v180
    %v193 = vpop.xlane.xlu0 %192
    %194 = vadd.xlane.f32.xlu0 %v181
    %v195 = vpop.xlane.xlu0 %194
    %196 = vadd.xlane.f32.xlu0 %v182
    %v197 = vpop.xlane.xlu0 %196
    %198 = vadd.xlane.f32.xlu0 %v183
    %v199 = vpop.xlane.xlu0 %198
    %v208 = vlaneseq
    %v209 = vand.u32 %v208, 127
    %v210 = vperm.slane %v185, %v209
    %v211 = vperm.slane %v187, %v209
    %v212 = vperm.slane %v189, %v209
    %v213 = vperm.slane %v191, %v209
    %v214 = vperm.slane %v193, %v209
    %v215 = vperm.slane %v195, %v209
    %v216 = vperm.slane %v197, %v209
    %v217 = vperm.slane %v199, %v209
    %vm218 = vcmask 1041409
    %v219 = vsel %vm218, %v211, %v210
    %vm220 = vcmask 1042434
    %v221 = vsel %vm220, %v212, %v219
    %vm222 = vcmask 1043459
    %v223 = vsel %vm222, %v213, %v221
    %vm224 = vcmask 1044484
    %v225 = vsel %vm224, %v214, %v223
    %vm226 = vcmask 1045509
    %v227 = vsel %vm226, %v215, %v225
    %vm228 = vcmask 1046534
    %v229 = vsel %vm228, %v216, %v227
    %vm230 = vcmask 1047559
    %v231 = vsel %vm230, %v217, %v229
    %vm233 = vcmask 64512
    %v234 = vsel %vm233, %v231, -inf
    %235 = vmax.xlane.f32.xlu0 %v234
    %v236 = vpop.xlane.xlu0 %235
    %v238 = vperm.slane %v236, 0
    %v239 = vperm.slane %v236, 1
    %v240 = vperm.slane %v236, 2
    %v241 = vperm.slane %v236, 3
    %v242 = vperm.slane %v236, 4
    %v243 = vperm.slane %v236, 5
    %v244 = vperm.slane %v236, 6
    %v245 = vperm.slane %v236, 7
    %v254 = vsub.f32 %v185, %v238
    %v255 = vsub.f32 %v187, %v239
    %v256 = vsub.f32 %v189, %v240
    %v257 = vsub.f32 %v191, %v241
    %v258 = vsub.f32 %v193, %v242
    %v259 = vsub.f32 %v195, %v243
    %v260 = vsub.f32 %v197, %v244
    %v261 = vsub.f32 %v199, %v245
    %v262 = vmul.f32 %v254, 1.442695
    %v263 = vpow.pop %v262
    %v264 = vmul.f32 %v255, 1.442695
    %v265 = vpow.pop %v264
    %v266 = vmul.f32 %v256, 1.442695
    %v267 = vpow.pop %v266
    %v268 = vmul.f32 %v257, 1.442695
    %v269 = vpow.pop %v268
    %v270 = vmul.f32 %v258, 1.442695
    %v271 = vpow.pop %v270
    %v272 = vmul.f32 %v259, 1.442695
    %v273 = vpow.pop %v272
    %v274 = vmul.f32 %v260, 1.442695
    %v275 = vpow.pop %v274
    %v276 = vmul.f32 %v261, 1.442695
    %v277 = vpow.pop %v276
    %286 = vset.pattern.permute.xlu0 0
    %287 = vperm.xlu0 %286, %v263
    %v288 = vpop.permute.xlu0 %287
    %289 = vset.pattern.permute.xlu0 0
    %290 = vperm.xlu0 %289, %v265
    %v291 = vpop.permute.xlu0 %290
    %292 = vset.pattern.permute.xlu0 0
    %293 = vperm.xlu0 %292, %v267
    %v294 = vpop.permute.xlu0 %293
    %295 = vset.pattern.permute.xlu0 0
    %296 = vperm.xlu0 %295, %v269
    %v297 = vpop.permute.xlu0 %296
    %298 = vset.pattern.permute.xlu0 0
    %299 = vperm.xlu0 %298, %v271
    %v300 = vpop.permute.xlu0 %299
    %301 = vset.pattern.permute.xlu0 0
    %302 = vperm.xlu0 %301, %v273
    %v303 = vpop.permute.xlu0 %302
    %304 = vset.pattern.permute.xlu0 0
    %305 = vperm.xlu0 %304, %v275
    %v306 = vpop.permute.xlu0 %305
    %307 = vset.pattern.permute.xlu0 0
    %308 = vperm.xlu0 %307, %v277
    %v309 = vpop.permute.xlu0 %308
    %v310 = vperm.slane %v288, %v209
    %v311 = vperm.slane %v291, %v209
    %v312 = vperm.slane %v294, %v209
    %v313 = vperm.slane %v297, %v209
    %v314 = vperm.slane %v300, %v209
    %v315 = vperm.slane %v303, %v209
    %v316 = vperm.slane %v306, %v209
    %v317 = vperm.slane %v309, %v209
    %v318 = vsel %vm218, %v311, %v310
    %v319 = vsel %vm220, %v312, %v318
    %v320 = vsel %vm222, %v313, %v319
    %v321 = vsel %vm224, %v314, %v320
    %v322 = vsel %vm226, %v315, %v321
    %v323 = vsel %vm228, %v316, %v322
    %v324 = vsel %vm230, %v317, %v323
    %v326 = vsel %vm233, %v324, 0.0
    %327 = vadd.xlane.f32.xlu0 %v326
    %v328 = vpop.xlane.xlu0 %327
    %v330 = vperm.slane %v328, 0
    %v331 = vperm.slane %v328, 1
    %v332 = vperm.slane %v328, 2
    %v333 = vperm.slane %v328, 3
    %v334 = vperm.slane %v328, 4
    %v335 = vperm.slane %v328, 5
    %v336 = vperm.slane %v328, 6
    %v337 = vperm.slane %v328, 7
    %v346 = vrcp.pop %v330
    %v347 = vmul.f32 %v330, %v346
    %v348 = vsub.f32 1.0, %v347
    %v349 = vmul.f32 %v346, %v348
    %v350 = vadd.f32 %v346, %v349
    %vm351 = vweird.f32 %v330
    %vm352 = vweird.f32 %v346
    %vm353 = vmor %vm351, %vm352
    %v354 = vsel %vm353, %v346, %v350
    %v355 = vand.u32 2147483647, %v330
    %vm356 = vcmp.eq.f32.partialorder %v355, 8.507059e+37
    %v357 = vand.u32 %v330, 2147483648
    %v358 = vor.u32 1.1754944e-38, %v357
    %v359 = vsel %vm356, %v358, %v354
    %v360 = vmul.f32 %v263, %v359
    %v361 = vrcp.pop %v331
    %v362 = vmul.f32 %v331, %v361
    %v363 = vsub.f32 1.0, %v362
    %v364 = vmul.f32 %v361, %v363
    %v365 = vadd.f32 %v361, %v364
    %vm366 = vweird.f32 %v331
    %vm367 = vweird.f32 %v361
    %vm368 = vmor %vm366, %vm367
    %v369 = vsel %vm368, %v361, %v365
    %v370 = vand.u32 2147483647, %v331
    %vm371 = vcmp.eq.f32.partialorder %v370, 8.507059e+37
    %v372 = vand.u32 %v331, 2147483648
    %v373 = vor.u32 1.1754944e-38, %v372
    %v374 = vsel %vm371, %v373, %v369
    %v375 = vmul.f32 %v265, %v374
    %v376 = vrcp.pop %v332
    %v377 = vmul.f32 %v332, %v376
    %v378 = vsub.f32 1.0, %v377
    %v379 = vmul.f32 %v376, %v378
    %v380 = vadd.f32 %v376, %v379
    %vm381 = vweird.f32 %v332
    %vm382 = vweird.f32 %v376
    %vm383 = vmor %vm381, %vm382
    %v384 = vsel %vm383, %v376, %v380
    %v385 = vand.u32 2147483647, %v332
    %vm386 = vcmp.eq.f32.partialorder %v385, 8.507059e+37
    %v387 = vand.u32 %v332, 2147483648
    %v388 = vor.u32 1.1754944e-38, %v387
    %v389 = vsel %vm386, %v388, %v384
    %v390 = vmul.f32 %v267, %v389
    %v391 = vrcp.pop %v333
    %v392 = vmul.f32 %v333, %v391
    %v393 = vsub.f32 1.0, %v392
    %v394 = vmul.f32 %v391, %v393
    %v395 = vadd.f32 %v391, %v394
    %vm396 = vweird.f32 %v333
    %vm397 = vweird.f32 %v391
    %vm398 = vmor %vm396, %vm397
    %v399 = vsel %vm398, %v391, %v395
    %v400 = vand.u32 2147483647, %v333
    %vm401 = vcmp.eq.f32.partialorder %v400, 8.507059e+37
    %v402 = vand.u32 %v333, 2147483648
    %v403 = vor.u32 1.1754944e-38, %v402
    %v404 = vsel %vm401, %v403, %v399
    %v405 = vmul.f32 %v269, %v404
    %v406 = vrcp.pop %v334
    %v407 = vmul.f32 %v334, %v406
    %v408 = vsub.f32 1.0, %v407
    %v409 = vmul.f32 %v406, %v408
    %v410 = vadd.f32 %v406, %v409
    %vm411 = vweird.f32 %v334
    %vm412 = vweird.f32 %v406
    %vm413 = vmor %vm411, %vm412
    %v414 = vsel %vm413, %v406, %v410
    %v415 = vand.u32 2147483647, %v334
    %vm416 = vcmp.eq.f32.partialorder %v415, 8.507059e+37
    %v417 = vand.u32 %v334, 2147483648
    %v418 = vor.u32 1.1754944e-38, %v417
    %v419 = vsel %vm416, %v418, %v414
    %v420 = vmul.f32 %v271, %v419
    %v421 = vrcp.pop %v335
    %v422 = vmul.f32 %v335, %v421
    %v423 = vsub.f32 1.0, %v422
    %v424 = vmul.f32 %v421, %v423
    %v425 = vadd.f32 %v421, %v424
    %vm426 = vweird.f32 %v335
    %vm427 = vweird.f32 %v421
    %vm428 = vmor %vm426, %vm427
    %v429 = vsel %vm428, %v421, %v425
    %v430 = vand.u32 2147483647, %v335
    %vm431 = vcmp.eq.f32.partialorder %v430, 8.507059e+37
    %v432 = vand.u32 %v335, 2147483648
    %v433 = vor.u32 1.1754944e-38, %v432
    %v434 = vsel %vm431, %v433, %v429
    %v435 = vmul.f32 %v273, %v434
    %v436 = vrcp.pop %v336
    %v437 = vmul.f32 %v336, %v436
    %v438 = vsub.f32 1.0, %v437
    %v439 = vmul.f32 %v436, %v438
    %v440 = vadd.f32 %v436, %v439
    %vm441 = vweird.f32 %v336
    %vm442 = vweird.f32 %v436
    %vm443 = vmor %vm441, %vm442
    %v444 = vsel %vm443, %v436, %v440
    %v445 = vand.u32 2147483647, %v336
    %vm446 = vcmp.eq.f32.partialorder %v445, 8.507059e+37
    %v447 = vand.u32 %v336, 2147483648
    %v448 = vor.u32 1.1754944e-38, %v447
    %v449 = vsel %vm446, %v448, %v444
    %v450 = vmul.f32 %v275, %v449
    %v451 = vrcp.pop %v337
    %v452 = vmul.f32 %v337, %v451
    %v453 = vsub.f32 1.0, %v452
    %v454 = vmul.f32 %v451, %v453
    %v455 = vadd.f32 %v451, %v454
    %vm456 = vweird.f32 %v337
    %vm457 = vweird.f32 %v451
    %vm458 = vmor %vm456, %vm457
    %v459 = vsel %vm458, %v451, %v455
    %v460 = vand.u32 2147483647, %v337
    %vm461 = vcmp.eq.f32.partialorder %v460, 8.507059e+37
    %v462 = vand.u32 %v337, 2147483648
    %v463 = vor.u32 1.1754944e-38, %v462
    %v464 = vsel %vm461, %v463, %v459
    %v465 = vmul.f32 %v277, %v464
    %474 = vset.pattern.permute.xlu0 0
    %475 = vperm.xlu0 %474, %v360
    %v476 = vpop.permute.xlu0 %475
    %477 = vset.pattern.permute.xlu0 0
    %478 = vperm.xlu0 %477, %v375
    %v479 = vpop.permute.xlu0 %478
    %480 = vset.pattern.permute.xlu0 0
    %481 = vperm.xlu0 %480, %v390
    %v482 = vpop.permute.xlu0 %481
    %483 = vset.pattern.permute.xlu0 0
    %484 = vperm.xlu0 %483, %v405
    %v485 = vpop.permute.xlu0 %484
    %486 = vset.pattern.permute.xlu0 0
    %487 = vperm.xlu0 %486, %v420
    %v488 = vpop.permute.xlu0 %487
    %489 = vset.pattern.permute.xlu0 0
    %490 = vperm.xlu0 %489, %v435
    %v491 = vpop.permute.xlu0 %490
    %492 = vset.pattern.permute.xlu0 0
    %493 = vperm.xlu0 %492, %v450
    %v494 = vpop.permute.xlu0 %493
    %495 = vset.pattern.permute.xlu0 0
    %496 = vperm.xlu0 %495, %v465
    %v497 = vpop.permute.xlu0 %496
    %v498 = vperm.slane %v476, %v209
    %v499 = vperm.slane %v479, %v209
    %v500 = vperm.slane %v482, %v209
    %v501 = vperm.slane %v485, %v209
    %v502 = vperm.slane %v488, %v209
    %v503 = vperm.slane %v491, %v209
    %v504 = vperm.slane %v494, %v209
    %v505 = vperm.slane %v497, %v209
    %v506 = vsel %vm218, %v499, %v498
    %v507 = vsel %vm220, %v500, %v506
    %v508 = vsel %vm222, %v501, %v507
    %v509 = vsel %vm224, %v502, %v508
    %v510 = vsel %vm226, %v503, %v509
    %v511 = vsel %vm228, %v504, %v510
    %v512 = vsel %vm230, %v505, %v511
    %514 = vst.msk [vmem:[#allocation9] sm:$0xff] %vm233, %v512
    %v523 = vmul.f32 %v476, %v66
    %v524 = vmul.f32 %v479, %v67
    %v525 = vmul.f32 %v482, %v68
    %v526 = vmul.f32 %v485, %v69
    %v527 = vmul.f32 %v488, %v70
    %v528 = vmul.f32 %v491, %v71
    %v529 = vmul.f32 %v494, %v72
    %v530 = vmul.f32 %v497, %v73
    %v531 = vrot.slane %v523, 4
    %v532 = vadd.f32 %v523, %v531
    %v533 = vrot.slane %v532, 2
    %v534 = vadd.f32 %v532, %v533
    %v535 = vrot.slane %v534, 1
    %v536 = vadd.f32 %v534, %v535
    %v537 = vrot.slane %v524, 4
    %v538 = vadd.f32 %v524, %v537
    %v539 = vrot.slane %v538, 2
    %v540 = vadd.f32 %v538, %v539
    %v541 = vrot.slane %v540, 1
    %v542 = vadd.f32 %v540, %v541
    %v543 = vrot.slane %v525, 4
    %v544 = vadd.f32 %v525, %v543
    %v545 = vrot.slane %v544, 2
    %v546 = vadd.f32 %v544, %v545
    %v547 = vrot.slane %v546, 1
    %v548 = vadd.f32 %v546, %v547
    %v549 = vrot.slane %v526, 4
    %v550 = vadd.f32 %v526, %v549
    %v551 = vrot.slane %v550, 2
    %v552 = vadd.f32 %v550, %v551
    %v553 = vrot.slane %v552, 1
    %v554 = vadd.f32 %v552, %v553
    %v555 = vrot.slane %v527, 4
    %v556 = vadd.f32 %v527, %v555
    %v557 = vrot.slane %v556, 2
    %v558 = vadd.f32 %v556, %v557
    %v559 = vrot.slane %v558, 1
    %v560 = vadd.f32 %v558, %v559
    %v561 = vrot.slane %v528, 4
    %v562 = vadd.f32 %v528, %v561
    %v563 = vrot.slane %v562, 2
    %v564 = vadd.f32 %v562, %v563
    %v565 = vrot.slane %v564, 1
    %v566 = vadd.f32 %v564, %v565
    %v567 = vrot.slane %v529, 4
    %v568 = vadd.f32 %v529, %v567
    %v569 = vrot.slane %v568, 2
    %v570 = vadd.f32 %v568, %v569
    %v571 = vrot.slane %v570, 1
    %v572 = vadd.f32 %v570, %v571
    %v573 = vrot.slane %v530, 4
    %v574 = vadd.f32 %v530, %v573
    %v575 = vrot.slane %v574, 2
    %v576 = vadd.f32 %v574, %v575
    %v577 = vrot.slane %v576, 1
    %v578 = vadd.f32 %v576, %v577
    %v587 = vsel %vm218, %v542, %v536
    %v588 = vsel %vm220, %v548, %v587
    %v589 = vsel %vm222, %v554, %v588
    %v590 = vsel %vm224, %v560, %v589
    %v591 = vsel %vm226, %v566, %v590
    %v592 = vsel %vm228, %v572, %v591
    %v593 = vsel %vm230, %v578, %v592
    %595 = vst [vmem:[#allocation8] sm:$0xff] %v593
    // Predicated region
    $region30: #{tpu_custom_call.1} parent=1 // pred_check
      _
    $region31: #{tpu_custom_call.1} parent=1 // pred_check_branch
      %597 = sbr.rel (0) target = $region33
    $region32: #{tpu_custom_call.1} parent=1 // pred_region
      %599 = vsyncadd [#allocation4], 0
      %s601 = sshll.u32 [#allocation8], 4
      %s602 = int_to_ptr.vmem [resolvable:$true] %s601
      %s603 = sshll.u32 %s4, 4
      %s604 = int_to_ptr.hbm [resolvable:$true] %s603
      %606 = dma.vmem_to_hbm [thread:$0]  %s602, 128, %s604, [#allocation4]
    $region33: #{tpu_custom_call.1} parent=1 // pred_fallthru
      _
    // Predicated region
    $region34: #{tpu_custom_call.1} parent=1 // pred_check
      _
    $region35: #{tpu_custom_call.1} parent=1 // pred_check_branch
      %608 = sbr.rel (0) target = $region37
    $region36: #{tpu_custom_call.1} parent=1 // pred_region
      %610 = vsyncadd [#allocation10], 0
      %s612 = sshll.u32 [#allocation9], 4
      %s613 = int_to_ptr.vmem [resolvable:$true] %s612
      %s614 = sshll.u32 %s5, 4
      %s615 = int_to_ptr.hbm [resolvable:$true] %s614
      %617 = dma.vmem_to_hbm [thread:$0]  %s613, 128, %s615, [#allocation10]
    $region37: #{tpu_custom_call.1} parent=1 // pred_fallthru
      _
    // Predicated region
    $region38: #{tpu_custom_call.1} parent=1 // pred_check
      _
    $region39: #{tpu_custom_call.1} parent=1 // pred_check_branch
      %619 = sbr.rel (0) target = $region41
    $region40: #{tpu_custom_call.1} parent=1 // pred_region
      %621 = dma.done [#allocation4], 128
    $region41: #{tpu_custom_call.1} parent=1 // pred_fallthru
      _
    // Predicated region
    $region42: #{tpu_custom_call.1} parent=1 // pred_check
      _
    $region43: #{tpu_custom_call.1} parent=1 // pred_check_branch
      %623 = sbr.rel (0) target = $region45
    $region44: #{tpu_custom_call.1} parent=1 // pred_region
      %625 = dma.done [#allocation10], 128
    $region45: #{tpu_custom_call.1} parent=1 // pred_fallthru
      _
    %626 = vsyncpa [#allocation3], 1
    %627 = vsyncpa [#allocation6], 1
    %628 = vsyncpa [#allocation4], 1
    %629 = vsyncpa [#allocation10], 1

// kernel: tpu_custom_call.1
$region0: #{tpu_custom_call.1}
  #allocation0 [shape = 'u32[]', space=smem, size = 0x4, offset = 0x4, fixed_abs, tag = 'smem constant byte address 0x4 - core index']
  #allocation1 [shape = 'u32[72,128]{1,0:T(1,128)}', space=vmem, size = 0x9000, scoped, tag = 'internal scratch']
  %s0 = inlined_call_operand.hbm [shape: f32[8,128], index: 0, kind: input, shape index: {}]
  %s1 = inlined_call_operand.hbm [shape: f32[8,8,128], index: 1, kind: input, shape index: {}]
  %s2 = inlined_call_operand.hbm [shape: f32[128,128], index: 2, kind: input, shape index: {}]
  %s3 = inlined_call_operand.vmem [shape: f32[1,128], index: 3, kind: input, shape index: {}]
  %s4 = inlined_call_operand.hbm [shape: f32[8,128], index: 4, kind: output, shape index: {0}]
  %s5 = inlined_call_operand.hbm [shape: f32[8,8], index: 5, kind: output, shape index: {1}]
  %6 = xla_tuple %s4, %s5
  %s7 = sld [smem:[#allocation0]]
  $region46: #{tpu_custom_call.1} parent=0
    _
  %s9 = ssub.s32 1, %s7
  %s10 = scalar_select 0, %s9, %s7
  $region1: #{tpu_custom_call.1} parent=0
    #allocation2 [shape = 'u8[4096]{0}', space=vmem, size = 0x1000, scoped, tag = 'input window, operand 0, single buffered']
    #allocation3 [shape = 's32[1]{0}', space=sflag, size = 0x4, scoped, tag = 'scoped memory for tpu_custom_call.1']
    #allocation4 [shape = 's32[1]{0}', space=sflag, size = 0x4, scoped, tag = 'scoped memory for tpu_custom_call.1']
    #allocation5 [shape = 'u8[32768]{0}', space=vmem, size = 0x8000, scoped, tag = 'input window, operand 1, single buffered']
    #allocation6 [shape = 's32[1]{0}', space=sflag, size = 0x4, scoped, tag = 'scoped memory for tpu_custom_call.1']
    #allocation7 [shape = 'u8[65536]{0}', space=vmem, size = 0x10000, scoped, tag = 'input window, operand 2, single buffered']
    #allocation8 [shape = 'u8[4096]{0}', space=vmem, size = 0x1000, scoped, tag = 'output window, operand 0, single buffered']
    #allocation9 [shape = 'u8[4096]{0}', space=vmem, size = 0x1000, scoped, tag = 'output window, operand 1, single buffered']
    #allocation10 [shape = 's32[1]{0}', space=sflag, size = 0x4, scoped, tag = 'scoped memory for tpu_custom_call.1']
    %11 = vsyncpa [#allocation3], 0
    %12 = vsyncpa [#allocation6], 0
    %13 = vsyncpa [#allocation4], 0
    %14 = vsyncpa [#allocation10], 0
    // Predicated region
    $region2: #{tpu_custom_call.1} parent=1 // pred_check
      _
    $region3: #{tpu_custom_call.1} parent=1 // pred_check_branch
      %16 = sbr.rel (0) target = $region5
    $region4: #{tpu_custom_call.1} parent=1 // pred_region
      %18 = vsyncadd [#allocation3], 0
      %s20 = sshll.u32 %s0, 4
      %s21 = int_to_ptr.hbm [resolvable:$true] %s20
      %s22 = sshll.u32 [#allocation2], 4
      %s23 = int_to_ptr.vmem [resolvable:$true] %s22
      %25 = dma.hbm_to_vmem [thread:$0]  %s21, 128, %s23, [#allocation3]
    $region5: #{tpu_custom_call.1} parent=1 // pred_fallthru
      _
    // Predicated region
    $region6: #{tpu_custom_call.1} parent=1 // pred_check
      _
    $region7: #{tpu_custom_call.1} parent=1 // pred_check_branch
      %27 = sbr.rel (0) target = $region9
    $region8: #{tpu_custom_call.1} parent=1 // pred_region
      %29 = vsyncadd [#allocation6], 0
      %s30 = sshll.u32 %s1, 4
      %s31 = int_to_ptr.hbm [resolvable:$true] %s30
      %s32 = sshll.u32 [#allocation5], 4
      %s33 = int_to_ptr.vmem [resolvable:$true] %s32
      %38 = dma.hbm_to_vmem [thread:$0]  %s31, 1024, %s33, [#allocation6], 128, 128, 8
    $region9: #{tpu_custom_call.1} parent=1 // pred_fallthru
      _
    // Predicated region
    $region10: #{tpu_custom_call.1} parent=1 // pred_check
      _
    $region11: #{tpu_custom_call.1} parent=1 // pred_check_branch
      %40 = sbr.rel (0) target = $region13
    $region12: #{tpu_custom_call.1} parent=1 // pred_region
      %42 = vsyncadd [#allocation6], 0
      %s43 = sshll.u32 %s2, 4
      %s44 = int_to_ptr.hbm [resolvable:$true] %s43
      %s45 = sshll.u32 [#allocation7], 4
      %s46 = int_to_ptr.vmem [resolvable:$true] %s45
      %51 = dma.hbm_to_vmem [thread:$0]  %s44, 2048, %s46, [#allocation6], 128, 128, 8
    $region13: #{tpu_custom_call.1} parent=1 // pred_fallthru
      _
    // Predicated region
    $region14: #{tpu_custom_call.1} parent=1 // pred_check
      _
    $region15: #{tpu_custom_call.1} parent=1 // pred_check_branch
      %53 = sbr.rel (0) target = $region17
    $region16: #{tpu_custom_call.1} parent=1 // pred_region
      _
    $region17: #{tpu_custom_call.1} parent=1 // pred_fallthru
      _
    // Predicated region
    $region18: #{tpu_custom_call.1} parent=1 // pred_check
      _
    $region19: #{tpu_custom_call.1} parent=1 // pred_check_branch
      %55 = sbr.rel (0) target = $region21
    $region20: #{tpu_custom_call.1} parent=1 // pred_region
      %57 = dma.done [#allocation3], 128
    $region21: #{tpu_custom_call.1} parent=1 // pred_fallthru
      _
    // Predicated region
    $region22: #{tpu_custom_call.1} parent=1 // pred_check
      _
    $region23: #{tpu_custom_call.1} parent=1 // pred_check_branch
      %59 = sbr.rel (0) target = $region25
    $region24: #{tpu_custom_call.1} parent=1 // pred_region
      %61 = dma.done [#allocation6], 1024
    $region25: #{tpu_custom_call.1} parent=1 // pred_fallthru
      _
    // Predicated region
    $region26: #{tpu_custom_call.1} parent=1 // pred_check
      _
    $region27: #{tpu_custom_call.1} parent=1 // pred_check_branch
      %63 = sbr.rel (0) target = $region29
    $region28: #{tpu_custom_call.1} parent=1 // pred_region
      %65 = dma.done [#allocation6], 2048
    $region29: #{tpu_custom_call.1} parent=1 // pred_fallthru
      _
    %v66 = vld [vmem:[#allocation5] sm:$0xff]
    %v67 = vld [vmem:[#allocation5 + $0x8] sm:$0xff]
    %v68 = vld [vmem:[#allocation5 + $0x10] sm:$0xff]
    %v69 = vld [vmem:[#allocation5 + $0x18] sm:$0xff]
    %v70 = vld [vmem:[#allocation5 + $0x20] sm:$0xff]
    %v71 = vld [vmem:[#allocation5 + $0x28] sm:$0xff]
    %v72 = vld [vmem:[#allocation5 + $0x30] sm:$0xff]
    %v73 = vld [vmem:[#allocation5 + $0x38] sm:$0xff]
    %v74 = vld [vmem:[#allocation7] sm:$0xff]
    %v75 = vld [vmem:[#allocation7 + $0x8] sm:$0xff]
    %v76 = vld [vmem:[#allocation7 + $0x10] sm:$0xff]
    %v77 = vld [vmem:[#allocation7 + $0x18] sm:$0xff]
    %v78 = vld [vmem:[#allocation7 + $0x20] sm:$0xff]
    %v79 = vld [vmem:[#allocation7 + $0x28] sm:$0xff]
    %v80 = vld [vmem:[#allocation7 + $0x30] sm:$0xff]
    %v81 = vld [vmem:[#allocation7 + $0x38] sm:$0xff]
    %v82 = vld [vmem:[#allocation7 + $0x40] sm:$0xff]
    %v83 = vld [vmem:[#allocation7 + $0x48] sm:$0xff]
    %v84 = vld [vmem:[#allocation7 + $0x50] sm:$0xff]
    %v85 = vld [vmem:[#allocation7 + $0x58] sm:$0xff]
    %v86 = vld [vmem:[#allocation7 + $0x60] sm:$0xff]
    %v87 = vld [vmem:[#allocation7 + $0x68] sm:$0xff]
    %v88 = vld [vmem:[#allocation7 + $0x70] sm:$0xff]
    %v89 = vld [vmem:[#allocation7 + $0x78] sm:$0xff]
    %90 = vmatpush.msra.mxu0 %v89
    %91 = vmatpush.msra.mxu0 %v88
    %92 = vmatpush.msra.mxu0 %v87
    %93 = vmatpush.msra.mxu0 %v86
    %94 = vmatpush.msra.mxu0 %v85
    %95 = vmatpush.msra.mxu0 %v84
    %96 = vmatpush.msra.mxu0 %v83
    %97 = vmatpush.msra.mxu0 %v82
    %98 = vmatpush.msra.mxu0 %v81
    %99 = vmatpush.msra.mxu0 %v80
    %100 = vmatpush.msra.mxu0 %v79
    %101 = vmatpush.msra.mxu0 %v78
    %102 = vmatpush.msra.mxu0 %v77
    %103 = vmatpush.msra.mxu0 %v76
    %104 = vmatpush.msra.mxu0 %v75
    %105 = vmatpush.msra.mxu0 %v74
    %106 = vmatmul.f32.gmra.mxu0 %v66
    %v107 = vpop.f32.mrf.mxu0
    %v108 = vadd.f32 0.0, %v107
    %109 = vmatmul.f32.gmra.mxu0 %v67
    %v110 = vpop.f32.mrf.mxu0
    %v111 = vadd.f32 0.0, %v110
    %112 = vmatmul.f32.gmra.mxu0 %v68
    %v113 = vpop.f32.mrf.mxu0
    %v114 = vadd.f32 0.0, %v113
    %115 = vmatmul.f32.gmra.mxu0 %v69
    %v116 = vpop.f32.mrf.mxu0
    %v117 = vadd.f32 0.0, %v116
    %118 = vmatmul.f32.gmra.mxu0 %v70
    %v119 = vpop.f32.mrf.mxu0
    %v120 = vadd.f32 0.0, %v119
    %121 = vmatmul.f32.gmra.mxu0 %v71
    %v122 = vpop.f32.mrf.mxu0
    %v123 = vadd.f32 0.0, %v122
    %124 = vmatmul.f32.gmra.mxu0 %v72
    %v125 = vpop.f32.mrf.mxu0
    %v126 = vadd.f32 0.0, %v125
    %127 = vmatmul.f32.gmra.mxu0 %v73
    %v128 = vpop.f32.mrf.mxu0
    %v129 = vadd.f32 0.0, %v128
    %130 = vdwg.mxu0
    %v131 = vld [vmem:[#allocation2] sm:$0xff]
    %v133 = vrot.slane %v131, 1
    %v134 = vrot.slane %v131, 2
    %v135 = vrot.slane %v131, 3
    %v136 = vrot.slane %v131, 4
    %v137 = vrot.slane %v131, 5
    %v138 = vrot.slane %v131, 6
    %v139 = vrot.slane %v131, 7
    %v140 = vperm.slane %v131, 0
    %v141 = vperm.slane %v133, 0
    %v142 = vperm.slane %v134, 0
    %v143 = vperm.slane %v135, 0
    %v144 = vperm.slane %v136, 0
    %v145 = vperm.slane %v137, 0
    %v146 = vperm.slane %v138, 0
    %v147 = vperm.slane %v139, 0
    %v156 = vadd.f32 %v108, %v140
    %v157 = vadd.f32 %v111, %v141
    %v158 = vadd.f32 %v114, %v142
    %v159 = vadd.f32 %v117, %v143
    %v160 = vadd.f32 %v120, %v144
    %v161 = vadd.f32 %v123, %v145
    %v162 = vadd.f32 %v126, %v146
    %v163 = vadd.f32 %v129, %v147
    %v164 = vtanh.pop %v156
    %v165 = vtanh.pop %v157
    %v166 = vtanh.pop %v158
    %v167 = vtanh.pop %v159
    %v168 = vtanh.pop %v160
    %v169 = vtanh.pop %v161
    %v170 = vtanh.pop %v162
    %v171 = vtanh.pop %v163
    %v172 = vld [vmem:[%s3] sm:$0x1]
    %v174 = vperm.slane %v172, 0
    %v176 = vmul.f32 %v164, %v174
    %v177 = vmul.f32 %v165, %v174
    %v178 = vmul.f32 %v166, %v174
    %v179 = vmul.f32 %v167, %v174
    %v180 = vmul.f32 %v168, %v174
    %v181 = vmul.f32 %v169, %v174
    %v182 = vmul.f32 %v170, %v174
    %v183 = vmul.f32 %v171, %v174
    %184 = vadd.xlane.f32.xlu0 %v176
    %v185 = vpop.xlane.xlu0 %184
    %186 = vadd.xlane.f32.xlu0 %v177
    %v187 = vpop.xlane.xlu0 %186
    %188 = vadd.xlane.f32.xlu0 %v178
    %v189 = vpop.xlane.xlu0 %188
    %190 = vadd.xlane.f32.xlu0 %v179
    %v191 = vpop.xlane.xlu0 %190
    %192 = vadd.xlane.f32.xlu0 %v180
    %v193 = vpop.xlane.xlu0 %192
    %194 = vadd.xlane.f32.xlu0 %v181
    %v195 = vpop.xlane.xlu0 %194
    %196 = vadd.xlane.f32.xlu0 %v182
    %v197 = vpop.xlane.xlu0 %196
    %198 = vadd.xlane.f32.xlu0 %v183
    %v199 = vpop.xlane.xlu0 %198
    %v208 = vlaneseq
    %v209 = vand.u32 %v208, 127
    %v210 = vperm.slane %v185, %v209
    %v211 = vperm.slane %v187, %v209
    %v212 = vperm.slane %v189, %v209
    %v213 = vperm.slane %v191, %v209
    %v214 = vperm.slane %v193, %v209
    %v215 = vperm.slane %v195, %v209
    %v216 = vperm.slane %v197, %v209
    %v217 = vperm.slane %v199, %v209
    %vm218 = vcmask 1041409
    %v219 = vsel %vm218, %v211, %v210
    %vm220 = vcmask 1042434
    %v221 = vsel %vm220, %v212, %v219
    %vm222 = vcmask 1043459
    %v223 = vsel %vm222, %v213, %v221
    %vm224 = vcmask 1044484
    %v225 = vsel %vm224, %v214, %v223
    %vm226 = vcmask 1045509
    %v227 = vsel %vm226, %v215, %v225
    %vm228 = vcmask 1046534
    %v229 = vsel %vm228, %v216, %v227
    %vm230 = vcmask 1047559
    %v231 = vsel %vm230, %v217, %v229
    %vm233 = vcmask 64512
    %v234 = vsel %vm233, %v231, -inf
    %235 = vmax.xlane.f32.xlu0 %v234
    %v236 = vpop.xlane.xlu0 %235
    %v238 = vperm.slane %v236, 0
    %v239 = vperm.slane %v236, 1
    %v240 = vperm.slane %v236, 2
    %v241 = vperm.slane %v236, 3
    %v242 = vperm.slane %v236, 4
    %v243 = vperm.slane %v236, 5
    %v244 = vperm.slane %v236, 6
    %v245 = vperm.slane %v236, 7
    %v254 = vsub.f32 %v185, %v238
    %v255 = vsub.f32 %v187, %v239
    %v256 = vsub.f32 %v189, %v240
    %v257 = vsub.f32 %v191, %v241
    %v258 = vsub.f32 %v193, %v242
    %v259 = vsub.f32 %v195, %v243
    %v260 = vsub.f32 %v197, %v244
    %v261 = vsub.f32 %v199, %v245
    %v262 = vmul.f32 %v254, 1.442695
    %v263 = vpow.pop %v262
    %v264 = vmul.f32 %v255, 1.442695
    %v265 = vpow.pop %v264
    %v266 = vmul.f32 %v256, 1.442695
    %v267 = vpow.pop %v266
    %v268 = vmul.f32 %v257, 1.442695
    %v269 = vpow.pop %v268
    %v270 = vmul.f32 %v258, 1.442695
    %v271 = vpow.pop %v270
    %v272 = vmul.f32 %v259, 1.442695
    %v273 = vpow.pop %v272
    %v274 = vmul.f32 %v260, 1.442695
    %v275 = vpow.pop %v274
    %v276 = vmul.f32 %v261, 1.442695
    %v277 = vpow.pop %v276
    %286 = vset.pattern.permute.xlu0 0
    %287 = vperm.xlu0 %286, %v263
    %v288 = vpop.permute.xlu0 %287
    %289 = vset.pattern.permute.xlu0 0
    %290 = vperm.xlu0 %289, %v265
    %v291 = vpop.permute.xlu0 %290
    %292 = vset.pattern.permute.xlu0 0
    %293 = vperm.xlu0 %292, %v267
    %v294 = vpop.permute.xlu0 %293
    %295 = vset.pattern.permute.xlu0 0
    %296 = vperm.xlu0 %295, %v269
    %v297 = vpop.permute.xlu0 %296
    %298 = vset.pattern.permute.xlu0 0
    %299 = vperm.xlu0 %298, %v271
    %v300 = vpop.permute.xlu0 %299
    %301 = vset.pattern.permute.xlu0 0
    %302 = vperm.xlu0 %301, %v273
    %v303 = vpop.permute.xlu0 %302
    %304 = vset.pattern.permute.xlu0 0
    %305 = vperm.xlu0 %304, %v275
    %v306 = vpop.permute.xlu0 %305
    %307 = vset.pattern.permute.xlu0 0
    %308 = vperm.xlu0 %307, %v277
    %v309 = vpop.permute.xlu0 %308
    %v310 = vperm.slane %v288, %v209
    %v311 = vperm.slane %v291, %v209
    %v312 = vperm.slane %v294, %v209
    %v313 = vperm.slane %v297, %v209
    %v314 = vperm.slane %v300, %v209
    %v315 = vperm.slane %v303, %v209
    %v316 = vperm.slane %v306, %v209
    %v317 = vperm.slane %v309, %v209
    %v318 = vsel %vm218, %v311, %v310
    %v319 = vsel %vm220, %v312, %v318
    %v320 = vsel %vm222, %v313, %v319
    %v321 = vsel %vm224, %v314, %v320
    %v322 = vsel %vm226, %v315, %v321
    %v323 = vsel %vm228, %v316, %v322
    %v324 = vsel %vm230, %v317, %v323
    %v326 = vsel %vm233, %v324, 0.0
    %327 = vadd.xlane.f32.xlu0 %v326
    %v328 = vpop.xlane.xlu0 %327
    %v330 = vperm.slane %v328, 0
    %v331 = vperm.slane %v328, 1
    %v332 = vperm.slane %v328, 2
    %v333 = vperm.slane %v328, 3
    %v334 = vperm.slane %v328, 4
    %v335 = vperm.slane %v328, 5
    %v336 = vperm.slane %v328, 6
    %v337 = vperm.slane %v328, 7
    %v346 = vrcp.pop %v330
    %v347 = vmul.f32 %v330, %v346
    %v348 = vsub.f32 1.0, %v347
    %v349 = vmul.f32 %v346, %v348
    %v350 = vadd.f32 %v346, %v349
    %vm351 = vweird.f32 %v330
    %vm352 = vweird.f32 %v346
    %vm353 = vmor %vm351, %vm352
    %v354 = vsel %vm353, %v346, %v350
    %v355 = vand.u32 2147483647, %v330
    %vm356 = vcmp.eq.f32.partialorder %v355, 8.507059e+37
    %v357 = vand.u32 %v330, 2147483648
    %v358 = vor.u32 1.1754944e-38, %v357
    %v359 = vsel %vm356, %v358, %v354
    %v360 = vmul.f32 %v263, %v359
    %v361 = vrcp.pop %v331
    %v362 = vmul.f32 %v331, %v361
    %v363 = vsub.f32 1.0, %v362
    %v364 = vmul.f32 %v361, %v363
    %v365 = vadd.f32 %v361, %v364
    %vm366 = vweird.f32 %v331
    %vm367 = vweird.f32 %v361
    %vm368 = vmor %vm366, %vm367
    %v369 = vsel %vm368, %v361, %v365
    %v370 = vand.u32 2147483647, %v331
    %vm371 = vcmp.eq.f32.partialorder %v370, 8.507059e+37
    %v372 = vand.u32 %v331, 2147483648
    %v373 = vor.u32 1.1754944e-38, %v372
    %v374 = vsel %vm371, %v373, %v369
    %v375 = vmul.f32 %v265, %v374
    %v376 = vrcp.pop %v332
    %v377 = vmul.f32 %v332, %v376
    %v378 = vsub.f32 1.0, %v377
    %v379 = vmul.f32 %v376, %v378
    %v380 = vadd.f32 %v376, %v379
    %vm381 = vweird.f32 %v332
    %vm382 = vweird.f32 %v376
    %vm383 = vmor %vm381, %vm382
    %v384 = vsel %vm383, %v376, %v380
    %v385 = vand.u32 2147483647, %v332
    %vm386 = vcmp.eq.f32.partialorder %v385, 8.507059e+37
    %v387 = vand.u32 %v332, 2147483648
    %v388 = vor.u32 1.1754944e-38, %v387
    %v389 = vsel %vm386, %v388, %v384
    %v390 = vmul.f32 %v267, %v389
    %v391 = vrcp.pop %v333
    %v392 = vmul.f32 %v333, %v391
    %v393 = vsub.f32 1.0, %v392
    %v394 = vmul.f32 %v391, %v393
    %v395 = vadd.f32 %v391, %v394
    %vm396 = vweird.f32 %v333
    %vm397 = vweird.f32 %v391
    %vm398 = vmor %vm396, %vm397
    %v399 = vsel %vm398, %v391, %v395
    %v400 = vand.u32 2147483647, %v333
    %vm401 = vcmp.eq.f32.partialorder %v400, 8.507059e+37
    %v402 = vand.u32 %v333, 2147483648
    %v403 = vor.u32 1.1754944e-38, %v402
    %v404 = vsel %vm401, %v403, %v399
    %v405 = vmul.f32 %v269, %v404
    %v406 = vrcp.pop %v334
    %v407 = vmul.f32 %v334, %v406
    %v408 = vsub.f32 1.0, %v407
    %v409 = vmul.f32 %v406, %v408
    %v410 = vadd.f32 %v406, %v409
    %vm411 = vweird.f32 %v334
    %vm412 = vweird.f32 %v406
    %vm413 = vmor %vm411, %vm412
    %v414 = vsel %vm413, %v406, %v410
    %v415 = vand.u32 2147483647, %v334
    %vm416 = vcmp.eq.f32.partialorder %v415, 8.507059e+37
    %v417 = vand.u32 %v334, 2147483648
    %v418 = vor.u32 1.1754944e-38, %v417
    %v419 = vsel %vm416, %v418, %v414
    %v420 = vmul.f32 %v271, %v419
    %v421 = vrcp.pop %v335
    %v422 = vmul.f32 %v335, %v421
    %v423 = vsub.f32 1.0, %v422
    %v424 = vmul.f32 %v421, %v423
    %v425 = vadd.f32 %v421, %v424
    %vm426 = vweird.f32 %v335
    %vm427 = vweird.f32 %v421
    %vm428 = vmor %vm426, %vm427
    %v429 = vsel %vm428, %v421, %v425
    %v430 = vand.u32 2147483647, %v335
    %vm431 = vcmp.eq.f32.partialorder %v430, 8.507059e+37
    %v432 = vand.u32 %v335, 2147483648
    %v433 = vor.u32 1.1754944e-38, %v432
    %v434 = vsel %vm431, %v433, %v429
    %v435 = vmul.f32 %v273, %v434
    %v436 = vrcp.pop %v336
    %v437 = vmul.f32 %v336, %v436
    %v438 = vsub.f32 1.0, %v437
    %v439 = vmul.f32 %v436, %v438
    %v440 = vadd.f32 %v436, %v439
    %vm441 = vweird.f32 %v336
    %vm442 = vweird.f32 %v436
    %vm443 = vmor %vm441, %vm442
    %v444 = vsel %vm443, %v436, %v440
    %v445 = vand.u32 2147483647, %v336
    %vm446 = vcmp.eq.f32.partialorder %v445, 8.507059e+37
    %v447 = vand.u32 %v336, 2147483648
    %v448 = vor.u32 1.1754944e-38, %v447
    %v449 = vsel %vm446, %v448, %v444
    %v450 = vmul.f32 %v275, %v449
    %v451 = vrcp.pop %v337
    %v452 = vmul.f32 %v337, %v451
    %v453 = vsub.f32 1.0, %v452
    %v454 = vmul.f32 %v451, %v453
    %v455 = vadd.f32 %v451, %v454
    %vm456 = vweird.f32 %v337
    %vm457 = vweird.f32 %v451
    %vm458 = vmor %vm456, %vm457
    %v459 = vsel %vm458, %v451, %v455
    %v460 = vand.u32 2147483647, %v337
    %vm461 = vcmp.eq.f32.partialorder %v460, 8.507059e+37
    %v462 = vand.u32 %v337, 2147483648
    %v463 = vor.u32 1.1754944e-38, %v462
    %v464 = vsel %vm461, %v463, %v459
    %v465 = vmul.f32 %v277, %v464
    %474 = vset.pattern.permute.xlu0 0
    %475 = vperm.xlu0 %474, %v360
    %v476 = vpop.permute.xlu0 %475
    %477 = vset.pattern.permute.xlu0 0
    %478 = vperm.xlu0 %477, %v375
    %v479 = vpop.permute.xlu0 %478
    %480 = vset.pattern.permute.xlu0 0
    %481 = vperm.xlu0 %480, %v390
    %v482 = vpop.permute.xlu0 %481
    %483 = vset.pattern.permute.xlu0 0
    %484 = vperm.xlu0 %483, %v405
    %v485 = vpop.permute.xlu0 %484
    %486 = vset.pattern.permute.xlu0 0
    %487 = vperm.xlu0 %486, %v420
    %v488 = vpop.permute.xlu0 %487
    %489 = vset.pattern.permute.xlu0 0
    %490 = vperm.xlu0 %489, %v435
    %v491 = vpop.permute.xlu0 %490
    %492 = vset.pattern.permute.xlu0 0
    %493 = vperm.xlu0 %492, %v450
    %v494 = vpop.permute.xlu0 %493
    %495 = vset.pattern.permute.xlu0 0
    %496 = vperm.xlu0 %495, %v465
    %v497 = vpop.permute.xlu0 %496
    %v498 = vperm.slane %v476, %v209
    %v499 = vperm.slane %v479, %v209
    %v500 = vperm.slane %v482, %v209
    %v501 = vperm.slane %v485, %v209
    %v502 = vperm.slane %v488, %v209
    %v503 = vperm.slane %v491, %v209
    %v504 = vperm.slane %v494, %v209
    %v505 = vperm.slane %v497, %v209
    %v506 = vsel %vm218, %v499, %v498
    %v507 = vsel %vm220, %v500, %v506
    %v508 = vsel %vm222, %v501, %v507
    %v509 = vsel %vm224, %v502, %v508
    %v510 = vsel %vm226, %v503, %v509
    %v511 = vsel %vm228, %v504, %v510
    %v512 = vsel %vm230, %v505, %v511
    %514 = vst.msk [vmem:[#allocation9] sm:$0xff] %vm233, %v512
    %v523 = vmul.f32 %v476, %v66
    %v524 = vmul.f32 %v479, %v67
    %v525 = vmul.f32 %v482, %v68
    %v526 = vmul.f32 %v485, %v69
    %v527 = vmul.f32 %v488, %v70
    %v528 = vmul.f32 %v491, %v71
    %v529 = vmul.f32 %v494, %v72
    %v530 = vmul.f32 %v497, %v73
    %v531 = vrot.slane %v523, 4
    %v532 = vadd.f32 %v523, %v531
    %v533 = vrot.slane %v532, 2
    %v534 = vadd.f32 %v532, %v533
    %v535 = vrot.slane %v534, 1
    %v536 = vadd.f32 %v534, %v535
    %v537 = vrot.slane %v524, 4
    %v538 = vadd.f32 %v524, %v537
    %v539 = vrot.slane %v538, 2
    %v540 = vadd.f32 %v538, %v539
    %v541 = vrot.slane %v540, 1
    %v542 = vadd.f32 %v540, %v541
    %v543 = vrot.slane %v525, 4
    %v544 = vadd.f32 %v525, %v543
    %v545 = vrot.slane %v544, 2
    %v546 = vadd.f32 %v544, %v545
    %v547 = vrot.slane %v546, 1
    %v548 = vadd.f32 %v546, %v547
    %v549 = vrot.slane %v526, 4
    %v550 = vadd.f32 %v526, %v549
    %v551 = vrot.slane %v550, 2
    %v552 = vadd.f32 %v550, %v551
    %v553 = vrot.slane %v552, 1
    %v554 = vadd.f32 %v552, %v553
    %v555 = vrot.slane %v527, 4
    %v556 = vadd.f32 %v527, %v555
    %v557 = vrot.slane %v556, 2
    %v558 = vadd.f32 %v556, %v557
    %v559 = vrot.slane %v558, 1
    %v560 = vadd.f32 %v558, %v559
    %v561 = vrot.slane %v528, 4
    %v562 = vadd.f32 %v528, %v561
    %v563 = vrot.slane %v562, 2
    %v564 = vadd.f32 %v562, %v563
    %v565 = vrot.slane %v564, 1
    %v566 = vadd.f32 %v564, %v565
    %v567 = vrot.slane %v529, 4
    %v568 = vadd.f32 %v529, %v567
    %v569 = vrot.slane %v568, 2
    %v570 = vadd.f32 %v568, %v569
    %v571 = vrot.slane %v570, 1
    %v572 = vadd.f32 %v570, %v571
    %v573 = vrot.slane %v530, 4
    %v574 = vadd.f32 %v530, %v573
    %v575 = vrot.slane %v574, 2
    %v576 = vadd.f32 %v574, %v575
    %v577 = vrot.slane %v576, 1
    %v578 = vadd.f32 %v576, %v577
    %v587 = vsel %vm218, %v542, %v536
    %v588 = vsel %vm220, %v548, %v587
    %v589 = vsel %vm222, %v554, %v588
    %v590 = vsel %vm224, %v560, %v589
    %v591 = vsel %vm226, %v566, %v590
    %v592 = vsel %vm228, %v572, %v591
    %v593 = vsel %vm230, %v578, %v592
    %595 = vst [vmem:[#allocation8] sm:$0xff] %v593
    // Predicated region
    $region30: #{tpu_custom_call.1} parent=1 // pred_check
      _
    $region31: #{tpu_custom_call.1} parent=1 // pred_check_branch
      %597 = sbr.rel (0) target = $region33
    $region32: #{tpu_custom_call.1} parent=1 // pred_region
      %599 = vsyncadd [#allocation4], 0
      %s601 = sshll.u32 [#allocation8], 4
      %s602 = int_to_ptr.vmem [resolvable:$true] %s601
      %s603 = sshll.u32 %s4, 4
      %s604 = int_to_ptr.hbm [resolvable:$true] %s603
      %606 = dma.vmem_to_hbm [thread:$0]  %s602, 128, %s604, [#allocation4]
    $region33: #{tpu_custom_call.1} parent=1 // pred_fallthru
      _
    // Predicated region
    $region34: #{tpu_custom_call.1} parent=1 // pred_check
      _
    $region35: #{tpu_custom_call.1} parent=1 // pred_check_branch
      %608 = sbr.rel (0) target = $region37
    $region36: #{tpu_custom_call.1} parent=1 // pred_region
      %610 = vsyncadd [#allocation10], 0
      %s612 = sshll.u32 [#allocation9], 4
      %s613 = int_to_ptr.vmem [resolvable:$true] %s612
      %s614 = sshll.u32 %s5, 4
      %s615 = int_to_ptr.hbm [resolvable:$true] %s614
      %617 = dma.vmem_to_hbm [thread:$0]  %s613, 128, %s615, [#allocation10]
    $region37: #{tpu_custom_call.1} parent=1 // pred_fallthru
      _
    // Predicated region
    $region38: #{tpu_custom_call.1} parent=1 // pred_check
      _
    $region39: #{tpu_custom_call.1} parent=1 // pred_check_branch
      %619 = sbr.rel (0) target = $region41
    $region40: #{tpu_custom_call.1} parent=1 // pred_region
      %621 = dma.done [#allocation4], 128
    $region41: #{tpu_custom_call.1} parent=1 // pred_fallthru
      _
    // Predicated region
    $region42: #{tpu_custom_call.1} parent=1 // pred_check
      _
    $region43: #{tpu_custom_call.1} parent=1 // pred_check_branch
      %623 = sbr.rel (0) target = $region45
    $region44: #{tpu_custom_call.1} parent=1 // pred_region
      %625 = dma.done [#allocation10], 128
    $region45: #{tpu_custom_call.1} parent=1 // pred_fallthru
      _
    %626 = vsyncpa [#allocation3], 1
    %627 = vsyncpa [#allocation6], 1
    %628 = vsyncpa [#allocation4], 1
    %629 = vsyncpa [#allocation10], 1

</llo_original>
